<compile_context>
chip_gen: v7x
topology: tpu7x:2x2x1
jax: 0.10.0
libtpu: 0.0.40
codegen_flags: <defaults>
</compile_context>

<pallas_src>
import jax
import jax.numpy as jnp
from jax import lax
from jax.experimental import pallas as pl
from jax.experimental.pallas import tpu as pltpu

_LANE = 128


def _round_up(n: int, m: int) -> int:
    return (n + m - 1) // m * m


def _pad2d(w, rows, cols):
    r, c = w.shape
    return jnp.pad(w, ((0, rows - r), (0, cols - c)))


def _pad_bias(b, cols):
    return jnp.pad(b, (0, cols - b.shape[0])).reshape(1, cols)


def _vae_kernel(x_ref, eps_ref,
                we_ref, be_ref, wa_ref, ba_ref, wv_ref, bv_ref,
                wl_ref, bl_ref, wd_ref, bd_ref,
                y_ref, avg_ref, var_ref):
    # PyTorch nn.Linear weight is (out, in): contract x @ W.T directly on the MXU
    # (contraction dim 1 of both operands) -> no external transpose / extra HBM copy.
    dn = (((1,), (1,)), ((), ()))

    def linear(h, w_ref, b_ref):
        acc = lax.dot_general(h, w_ref[...], dn,
                              preferred_element_type=jnp.float32)
        return acc + b_ref[...]                      # bias broadcast over rows

    x = x_ref[...].astype(jnp.float32)

    # Encoder: relu(Linear(input, embedding))
    h = jnp.maximum(linear(x, we_ref, be_ref), 0.0)

    # Mean / variance heads
    avg = linear(h, wa_ref, ba_ref)
    v_pre = linear(h, wv_ref, bv_ref)
    # Numerically stable softplus built only from exp/log (EUP-friendly).
    var = jnp.maximum(v_pre, 0.0) + jnp.log(1.0 + jnp.exp(-jnp.abs(v_pre)))

    # Reparameterization: z = avg + sqrt(var) * eps
    z = avg + jnp.sqrt(var) * eps_ref[...].astype(jnp.float32)

    # Latent projection: relu(Linear(latent, embedding))
    z = jnp.maximum(linear(z, wl_ref, bl_ref), 0.0)

    # Decoder: sigmoid(Linear(embedding, input))
    logits = linear(z, wd_ref, bd_ref)
    y = 1.0 / (1.0 + jnp.exp(-logits))

    y_ref[...] = y.astype(y_ref.dtype)
    avg_ref[...] = avg.astype(avg_ref.dtype)
    var_ref[...] = var.astype(var_ref.dtype)


def vae_forward(x, eps, params, *, block_rows=None):
    """Fused VAE forward. params = (w_enc, b_enc, w_avg, b_avg, w_var, b_var,
    w_lat, b_lat, w_dec, b_dec) in PyTorch nn.Linear layout (out_features, in_features)."""
    (w_enc, b_enc, w_avg, b_avg, w_var, b_var,
     w_lat, b_lat, w_dec, b_dec) = params

    batch, input_size = x.shape
    embedding_size = w_enc.shape[0]
    latent_size = w_avg.shape[0]

    # Lane-dense padded feature dims (multiples of 128).
    in_p = _round_up(input_size, _LANE)
    emb_p = _round_up(embedding_size, _LANE)
    lat_p = _round_up(latent_size, _LANE)

    # Batch tile: big enough to pipeline/saturate HBM for large batches,
    # but never larger than needed. (Weights are tiny and stay VMEM-resident.)
    if block_rows is None:
        block_rows = max(8, min(512, _round_up(batch, 8)))
    tm = block_rows
    b_p = _round_up(batch, tm)
    grid = (b_p // tm,)

    # Zero padding keeps the math exact for the real rows/columns
    # (padded h columns are relu(0)=0; padded eps columns are 0, so padded z
    #  columns contribute nothing; padded outputs are sliced away below).
    x_p = jnp.pad(x, ((0, b_p - batch), (0, in_p - input_size)))
    eps_p = jnp.pad(eps, ((0, b_p - batch), (0, lat_p - latent_size)))

    we = _pad2d(w_enc, emb_p, in_p);   be = _pad_bias(b_enc, emb_p)
    wa = _pad2d(w_avg, lat_p, emb_p);  ba = _pad_bias(b_avg, lat_p)
    wv = _pad2d(w_var, lat_p, emb_p);  bv = _pad_bias(b_var, lat_p)
    wl = _pad2d(w_lat, emb_p, lat_p);  bl = _pad_bias(b_lat, emb_p)
    wd = _pad2d(w_dec, in_p, emb_p);   bd = _pad_bias(b_dec, in_p)

    def row_spec(cols):            # batch-tiled, pipelined across grid steps
        return pl.BlockSpec((tm, cols), lambda i: (i, 0))

    def resident(arr):             # constant index_map -> stays resident in VMEM
        return pl.BlockSpec(arr.shape, lambda i: (0, 0))

    y_p, avg_p, var_p = pl.pallas_call(
        _vae_kernel,
        out_shape=(
            jax.ShapeDtypeStruct((b_p, in_p), x.dtype),
            jax.ShapeDtypeStruct((b_p, lat_p), x.dtype),
            jax.ShapeDtypeStruct((b_p, lat_p), x.dtype),
        ),
        grid_spec=pltpu.PrefetchScalarGridSpec(
            num_scalar_prefetch=0,
            grid=grid,
            in_specs=[
                row_spec(in_p),            # x tile
                row_spec(lat_p),           # eps tile
                resident(we), resident(be),
                resident(wa), resident(ba),
                resident(wv), resident(bv),
                resident(wl), resident(bl),
                resident(wd), resident(bd),
            ],
            out_specs=[
                row_spec(in_p),            # y
                row_spec(lat_p),           # avg
                row_spec(lat_p),           # var
            ],
        ),
        compiler_params=pltpu.CompilerParams(
            dimension_semantics=("parallel",)),   # batch axis -> 2-TC shard on v7x
    )(x_p, eps_p, we, be, wa, ba, wv, bv, wl, bl, wd, bd)

    return (y_p[:batch, :input_size],
            avg_p[:batch, :latent_size],
            var_p[:batch, :latent_size])


if __name__ == "__main__":
    # Small shapes consistent with the module: VAE(input=32, embedding=16, latent=8)
    batch, input_size, embedding_size, latent_size = 8, 32, 16, 8

    key = jax.random.PRNGKey(0)
    keys = jax.random.split(key, 12)

    def linear_init(kw, kb, out_f, in_f):
        # PyTorch nn.Linear default init: U(-1/sqrt(in), 1/sqrt(in))
        bound = 1.0 / (in_f ** 0.5)
        w = jax.random.uniform(kw, (out_f, in_f), jnp.float32, -bound, bound)
        b = jax.random.uniform(kb, (out_f,), jnp.float32, -bound, bound)
        return w, b

    w_enc, b_enc = linear_init(keys[0], keys[1], embedding_size, input_size)
    w_avg, b_avg = linear_init(keys[2], keys[3], latent_size, embedding_size)
    w_var, b_var = linear_init(keys[4], keys[5], latent_size, embedding_size)
    w_lat, b_lat = linear_init(keys[6], keys[7], embedding_size, latent_size)
    w_dec, b_dec = linear_init(keys[8], keys[9], input_size, embedding_size)

    x = jax.random.normal(keys[10], (batch, input_size), dtype=jnp.float32)
    eps = jax.random.normal(keys[11], (batch, latent_size), dtype=jnp.float32)

    params = (w_enc, b_enc, w_avg, b_avg, w_var, b_var,
              w_lat, b_lat, w_dec, b_dec)

    y, avg, var = vae_forward(x, eps, params)
    jax.block_until_ready((y, avg, var))

    # Reference: plain-JAX forward with identical semantics to the PyTorch module.
    h = jnp.maximum(x @ w_enc.T + b_enc, 0.0)
    avg_r = h @ w_avg.T + b_avg
    var_r = jax.nn.softplus(h @ w_var.T + b_var)
    z = avg_r + jnp.sqrt(var_r) * eps
    z = jnp.maximum(z @ w_lat.T + b_lat, 0.0)
    y_r = jax.nn.sigmoid(z @ w_dec.T + b_dec)

    assert y.shape == (batch, input_size)
    assert avg.shape == (batch, latent_size)
    assert var.shape == (batch, latent_size)
    assert jnp.allclose(avg, avg_r, atol=1e-4, rtol=1e-4)
    assert jnp.allclose(var, var_r, atol=1e-4, rtol=1e-4)
    assert jnp.allclose(y, y_r, atol=1e-4, rtol=1e-4)

    print("KERNEL_OK")
</pallas_src>

<mosaic_0001>
module attributes {stable_mosaic.version = 11 : i64} {
  func.func @_vae_kernel(%arg0: i32, %arg1: memref<8x128xf32, #tpu.memory_space<vmem>>, %arg2: memref<8x128xf32, #tpu.memory_space<vmem>>, %arg3: memref<128x128xf32, #tpu.memory_space<vmem>>, %arg4: memref<1x128xf32, #tpu.memory_space<vmem>>, %arg5: memref<128x128xf32, #tpu.memory_space<vmem>>, %arg6: memref<1x128xf32, #tpu.memory_space<vmem>>, %arg7: memref<128x128xf32, #tpu.memory_space<vmem>>, %arg8: memref<1x128xf32, #tpu.memory_space<vmem>>, %arg9: memref<128x128xf32, #tpu.memory_space<vmem>>, %arg10: memref<1x128xf32, #tpu.memory_space<vmem>>, %arg11: memref<128x128xf32, #tpu.memory_space<vmem>>, %arg12: memref<1x128xf32, #tpu.memory_space<vmem>>, %arg13: memref<8x128xf32, #tpu.memory_space<vmem>>, %arg14: memref<8x128xf32, #tpu.memory_space<vmem>>, %arg15: memref<8x128xf32, #tpu.memory_space<vmem>>) attributes {dimension_semantics = [#tpu.dimension_semantics<parallel>], iteration_bounds = array<i64: 1>, scalar_prefetch = 0 : i64, scratch_operands = 0 : i64, tpu.core_type = #tpu.core_type<tc>, window_params = [{transform_indices = @transform_0, window_bounds = array<i64: 8, 128>}, {transform_indices = @transform_1, window_bounds = array<i64: 8, 128>}, {pipeline_mode = #tpu.pipeline_mode<synchronous>, transform_indices = @transform_2, window_bounds = array<i64: 128, 128>}, {pipeline_mode = #tpu.pipeline_mode<synchronous>, transform_indices = @transform_3, window_bounds = array<i64: 1, 128>}, {pipeline_mode = #tpu.pipeline_mode<synchronous>, transform_indices = @transform_4, window_bounds = array<i64: 128, 128>}, {pipeline_mode = #tpu.pipeline_mode<synchronous>, transform_indices = @transform_5, window_bounds = array<i64: 1, 128>}, {pipeline_mode = #tpu.pipeline_mode<synchronous>, transform_indices = @transform_6, window_bounds = array<i64: 128, 128>}, {pipeline_mode = #tpu.pipeline_mode<synchronous>, transform_indices = @transform_7, window_bounds = array<i64: 1, 128>}, {pipeline_mode = #tpu.pipeline_mode<synchronous>, transform_indices = @transform_8, window_bounds = array<i64: 128, 128>}, {pipeline_mode = #tpu.pipeline_mode<synchronous>, transform_indices = @transform_9, window_bounds = array<i64: 1, 128>}, {pipeline_mode = #tpu.pipeline_mode<synchronous>, transform_indices = @transform_10, window_bounds = array<i64: 128, 128>}, {pipeline_mode = #tpu.pipeline_mode<synchronous>, transform_indices = @transform_11, window_bounds = array<i64: 1, 128>}, {transform_indices = @transform_12, window_bounds = array<i64: 8, 128>}, {transform_indices = @transform_13, window_bounds = array<i64: 8, 128>}, {transform_indices = @transform_14, window_bounds = array<i64: 8, 128>}]} {
    %c0 = arith.constant 0 : index
    %c0_0 = arith.constant 0 : index
    %0 = vector.load %arg1[%c0, %c0_0] : memref<8x128xf32, #tpu.memory_space<vmem>>, vector<8x128xf32>
    %c0_1 = arith.constant 0 : index
    %c0_2 = arith.constant 0 : index
    %1 = vector.load %arg3[%c0_1, %c0_2] : memref<128x128xf32, #tpu.memory_space<vmem>>, vector<128x128xf32>
    %cst = arith.constant dense<0.000000e+00> : vector<8x128xf32>
    %2 = tpu.matmul %0, %1, %cst {dimension_numbers = #tpu.dot_dimension_numbers<[1], [1], [0], [0], [0, 0, 1, 0], [], []>} : vector<8x128xf32>, vector<128x128xf32>, vector<8x128xf32> -> vector<8x128xf32>
    %c0_3 = arith.constant 0 : index
    %c0_4 = arith.constant 0 : index
    %3 = vector.load %arg4[%c0_3, %c0_4] : memref<1x128xf32, #tpu.memory_space<vmem>>, vector<1x128xf32>
    %4 = vector.broadcast %3 : vector<1x128xf32> to vector<8x128xf32>
    %5 = arith.addf %2, %4 : vector<8x128xf32>
    %cst_5 = arith.constant 0.000000e+00 : f32
    %6 = vector.broadcast %cst_5 : f32 to vector<8x128xf32>
    %7 = arith.maximumf %5, %6 : vector<8x128xf32>
    %c0_6 = arith.constant 0 : index
    %c0_7 = arith.constant 0 : index
    %8 = vector.load %arg5[%c0_6, %c0_7] : memref<128x128xf32, #tpu.memory_space<vmem>>, vector<128x128xf32>
    %cst_8 = arith.constant dense<0.000000e+00> : vector<8x128xf32>
    %9 = tpu.matmul %7, %8, %cst_8 {dimension_numbers = #tpu.dot_dimension_numbers<[1], [1], [0], [0], [0, 0, 1, 0], [], []>} : vector<8x128xf32>, vector<128x128xf32>, vector<8x128xf32> -> vector<8x128xf32>
    %c0_9 = arith.constant 0 : index
    %c0_10 = arith.constant 0 : index
    %10 = vector.load %arg6[%c0_9, %c0_10] : memref<1x128xf32, #tpu.memory_space<vmem>>, vector<1x128xf32>
    %11 = vector.broadcast %10 : vector<1x128xf32> to vector<8x128xf32>
    %12 = arith.addf %9, %11 : vector<8x128xf32>
    %c0_11 = arith.constant 0 : index
    %c0_12 = arith.constant 0 : index
    %13 = vector.load %arg7[%c0_11, %c0_12] : memref<128x128xf32, #tpu.memory_space<vmem>>, vector<128x128xf32>
    %cst_13 = arith.constant dense<0.000000e+00> : vector<8x128xf32>
    %14 = tpu.matmul %7, %13, %cst_13 {dimension_numbers = #tpu.dot_dimension_numbers<[1], [1], [0], [0], [0, 0, 1, 0], [], []>} : vector<8x128xf32>, vector<128x128xf32>, vector<8x128xf32> -> vector<8x128xf32>
    %c0_14 = arith.constant 0 : index
    %c0_15 = arith.constant 0 : index
    %15 = vector.load %arg8[%c0_14, %c0_15] : memref<1x128xf32, #tpu.memory_space<vmem>>, vector<1x128xf32>
    %16 = vector.broadcast %15 : vector<1x128xf32> to vector<8x128xf32>
    %17 = arith.addf %14, %16 : vector<8x128xf32>
    %cst_16 = arith.constant 0.000000e+00 : f32
    %18 = vector.broadcast %cst_16 : f32 to vector<8x128xf32>
    %19 = arith.maximumf %17, %18 : vector<8x128xf32>
    %20 = math.absf %17 : vector<8x128xf32>
    %cst_17 = arith.constant 0.000000e+00 : f32
    %21 = vector.broadcast %cst_17 : f32 to vector<8x128xf32>
    %22 = arith.subf %21, %20 : vector<8x128xf32>
    %23 = math.exp %22 : vector<8x128xf32>
    %cst_18 = arith.constant 1.000000e+00 : f32
    %24 = vector.broadcast %cst_18 : f32 to vector<8x128xf32>
    %25 = arith.addf %24, %23 : vector<8x128xf32>
    %26 = math.log %25 : vector<8x128xf32>
    %27 = arith.addf %19, %26 : vector<8x128xf32>
    %28 = math.sqrt %27 : vector<8x128xf32>
    %c0_19 = arith.constant 0 : index
    %c0_20 = arith.constant 0 : index
    %29 = vector.load %arg2[%c0_19, %c0_20] : memref<8x128xf32, #tpu.memory_space<vmem>>, vector<8x128xf32>
    %30 = arith.mulf %28, %29 : vector<8x128xf32>
    %31 = arith.addf %12, %30 : vector<8x128xf32>
    %c0_21 = arith.constant 0 : index
    %c0_22 = arith.constant 0 : index
    %32 = vector.load %arg9[%c0_21, %c0_22] : memref<128x128xf32, #tpu.memory_space<vmem>>, vector<128x128xf32>
    %cst_23 = arith.constant dense<0.000000e+00> : vector<8x128xf32>
    %33 = tpu.matmul %31, %32, %cst_23 {dimension_numbers = #tpu.dot_dimension_numbers<[1], [1], [0], [0], [0, 0, 1, 0], [], []>} : vector<8x128xf32>, vector<128x128xf32>, vector<8x128xf32> -> vector<8x128xf32>
    %c0_24 = arith.constant 0 : index
    %c0_25 = arith.constant 0 : index
    %34 = vector.load %arg10[%c0_24, %c0_25] : memref<1x128xf32, #tpu.memory_space<vmem>>, vector<1x128xf32>
    %35 = vector.broadcast %34 : vector<1x128xf32> to vector<8x128xf32>
    %36 = arith.addf %33, %35 : vector<8x128xf32>
    %cst_26 = arith.constant 0.000000e+00 : f32
    %37 = vector.broadcast %cst_26 : f32 to vector<8x128xf32>
    %38 = arith.maximumf %36, %37 : vector<8x128xf32>
    %c0_27 = arith.constant 0 : index
    %c0_28 = arith.constant 0 : index
    %39 = vector.load %arg11[%c0_27, %c0_28] : memref<128x128xf32, #tpu.memory_space<vmem>>, vector<128x128xf32>
    %cst_29 = arith.constant dense<0.000000e+00> : vector<8x128xf32>
    %40 = tpu.matmul %38, %39, %cst_29 {dimension_numbers = #tpu.dot_dimension_numbers<[1], [1], [0], [0], [0, 0, 1, 0], [], []>} : vector<8x128xf32>, vector<128x128xf32>, vector<8x128xf32> -> vector<8x128xf32>
    %c0_30 = arith.constant 0 : index
    %c0_31 = arith.constant 0 : index
    %41 = vector.load %arg12[%c0_30, %c0_31] : memref<1x128xf32, #tpu.memory_space<vmem>>, vector<1x128xf32>
    %42 = vector.broadcast %41 : vector<1x128xf32> to vector<8x128xf32>
    %43 = arith.addf %40, %42 : vector<8x128xf32>
    %cst_32 = arith.constant 0.000000e+00 : f32
    %44 = vector.broadcast %cst_32 : f32 to vector<8x128xf32>
    %45 = arith.subf %44, %43 : vector<8x128xf32>
    %46 = math.exp %45 : vector<8x128xf32>
    %cst_33 = arith.constant 1.000000e+00 : f32
    %47 = vector.broadcast %cst_33 : f32 to vector<8x128xf32>
    %48 = arith.addf %47, %46 : vector<8x128xf32>
    %cst_34 = arith.constant 1.000000e+00 : f32
    %49 = vector.broadcast %cst_34 : f32 to vector<8x128xf32>
    %50 = arith.divf %49, %48 : vector<8x128xf32>
    %c0_35 = arith.constant 0 : index
    %c0_36 = arith.constant 0 : index
    %51 = vector.load %arg13[%c0_35, %c0_36] : memref<8x128xf32, #tpu.memory_space<vmem>>, vector<8x128xf32>
    tpu.vector_store %arg13[%c0_35, %c0_36], %50 {strides = array<i32>} : memref<8x128xf32, #tpu.memory_space<vmem>>, vector<8x128xf32>,
    %c0_37 = arith.constant 0 : index
    %c0_38 = arith.constant 0 : index
    %52 = vector.load %arg14[%c0_37, %c0_38] : memref<8x128xf32, #tpu.memory_space<vmem>>, vector<8x128xf32>
    tpu.vector_store %arg14[%c0_37, %c0_38], %12 {strides = array<i32>} : memref<8x128xf32, #tpu.memory_space<vmem>>, vector<8x128xf32>,
    %c0_39 = arith.constant 0 : index
    %c0_40 = arith.constant 0 : index
    %53 = vector.load %arg15[%c0_39, %c0_40] : memref<8x128xf32, #tpu.memory_space<vmem>>, vector<8x128xf32>
    tpu.vector_store %arg15[%c0_39, %c0_40], %27 {strides = array<i32>} : memref<8x128xf32, #tpu.memory_space<vmem>>, vector<8x128xf32>,
    return
  }
  func.func @transform_0(%arg0: i32) -> (i32, i32) {
    %c0_i32 = arith.constant 0 : i32
    %c0_i32_0 = arith.constant 0 : i32
    return %arg0, %c0_i32 : i32, i32
  }
  func.func @transform_1(%arg0: i32) -> (i32, i32) {
    %c0_i32 = arith.constant 0 : i32
    %c0_i32_0 = arith.constant 0 : i32
    return %arg0, %c0_i32 : i32, i32
  }
  func.func @transform_2(%arg0: i32) -> (i32, i32) {
    %c0_i32 = arith.constant 0 : i32
    %c0_i32_0 = arith.constant 0 : i32
    %c0_i32_1 = arith.constant 0 : i32
    return %c0_i32, %c0_i32_0 : i32, i32
  }
  func.func @transform_3(%arg0: i32) -> (i32, i32) {
    %c0_i32 = arith.constant 0 : i32
    %c0_i32_0 = arith.constant 0 : i32
    %c0_i32_1 = arith.constant 0 : i32
    return %c0_i32, %c0_i32_0 : i32, i32
  }
  func.func @transform_4(%arg0: i32) -> (i32, i32) {
    %c0_i32 = arith.constant 0 : i32
    %c0_i32_0 = arith.constant 0 : i32
    %c0_i32_1 = arith.constant 0 : i32
    return %c0_i32, %c0_i32_0 : i32, i32
  }
  func.func @transform_5(%arg0: i32) -> (i32, i32) {
    %c0_i32 = arith.constant 0 : i32
    %c0_i32_0 = arith.constant 0 : i32
    %c0_i32_1 = arith.constant 0 : i32
    return %c0_i32, %c0_i32_0 : i32, i32
  }
  func.func @transform_6(%arg0: i32) -> (i32, i32) {
    %c0_i32 = arith.constant 0 : i32
    %c0_i32_0 = arith.constant 0 : i32
    %c0_i32_1 = arith.constant 0 : i32
    return %c0_i32, %c0_i32_0 : i32, i32
  }
  func.func @transform_7(%arg0: i32) -> (i32, i32) {
    %c0_i32 = arith.constant 0 : i32
    %c0_i32_0 = arith.constant 0 : i32
    %c0_i32_1 = arith.constant 0 : i32
    return %c0_i32, %c0_i32_0 : i32, i32
  }
  func.func @transform_8(%arg0: i32) -> (i32, i32) {
    %c0_i32 = arith.constant 0 : i32
    %c0_i32_0 = arith.constant 0 : i32
    %c0_i32_1 = arith.constant 0 : i32
    return %c0_i32, %c0_i32_0 : i32, i32
  }
  func.func @transform_9(%arg0: i32) -> (i32, i32) {
    %c0_i32 = arith.constant 0 : i32
    %c0_i32_0 = arith.constant 0 : i32
    %c0_i32_1 = arith.constant 0 : i32
    return %c0_i32, %c0_i32_0 : i32, i32
  }
  func.func @transform_10(%arg0: i32) -> (i32, i32) {
    %c0_i32 = arith.constant 0 : i32
    %c0_i32_0 = arith.constant 0 : i32
    %c0_i32_1 = arith.constant 0 : i32
    return %c0_i32, %c0_i32_0 : i32, i32
  }
  func.func @transform_11(%arg0: i32) -> (i32, i32) {
    %c0_i32 = arith.constant 0 : i32
    %c0_i32_0 = arith.constant 0 : i32
    %c0_i32_1 = arith.constant 0 : i32
    return %c0_i32, %c0_i32_0 : i32, i32
  }
  func.func @transform_12(%arg0: i32) -> (i32, i32) {
    %c0_i32 = arith.constant 0 : i32
    %c0_i32_0 = arith.constant 0 : i32
    return %arg0, %c0_i32 : i32, i32
  }
  func.func @transform_13(%arg0: i32) -> (i32, i32) {
    %c0_i32 = arith.constant 0 : i32
    %c0_i32_0 = arith.constant 0 : i32
    return %arg0, %c0_i32 : i32, i32
  }
  func.func @transform_14(%arg0: i32) -> (i32, i32) {
    %c0_i32 = arith.constant 0 : i32
    %c0_i32_0 = arith.constant 0 : i32
    return %arg0, %c0_i32 : i32, i32
  }
}

</mosaic_0001>

<llo_original>
// kernel: tpu_custom_call.1
$region0: #{tpu_custom_call.1}
  #allocation0 [shape = 'u32[]', space=smem, size = 0x4, offset = 0x4, fixed_abs, tag = 'smem constant byte address 0x4 - core index']
  #allocation1 [shape = 'u32[144,128]{1,0:T(1,128)}', space=vmem, size = 0x12000, scoped, tag = 'internal scratch']
  %s0 = inlined_call_operand.hbm [shape: f32[8,128], index: 0, kind: input, shape index: {}]
  %s1 = inlined_call_operand.hbm [shape: f32[8,128], index: 1, kind: input, shape index: {}]
  %s2 = inlined_call_operand.hbm [shape: f32[128,128], index: 2, kind: input, shape index: {}]
  %s3 = inlined_call_operand.vmem [shape: f32[1,128], index: 3, kind: input, shape index: {}]
  %s4 = inlined_call_operand.hbm [shape: f32[128,128], index: 4, kind: input, shape index: {}]
  %s5 = inlined_call_operand.vmem [shape: f32[1,128], index: 5, kind: input, shape index: {}]
  %s6 = inlined_call_operand.hbm [shape: f32[128,128], index: 6, kind: input, shape index: {}]
  %s7 = inlined_call_operand.vmem [shape: f32[1,128], index: 7, kind: input, shape index: {}]
  %s8 = inlined_call_operand.hbm [shape: f32[128,128], index: 8, kind: input, shape index: {}]
  %s9 = inlined_call_operand.vmem [shape: f32[1,128], index: 9, kind: input, shape index: {}]
  %s10 = inlined_call_operand.hbm [shape: f32[128,128], index: 10, kind: input, shape index: {}]
  %s11 = inlined_call_operand.vmem [shape: f32[1,128], index: 11, kind: input, shape index: {}]
  %s12 = inlined_call_operand.hbm [shape: f32[8,128], index: 12, kind: output, shape index: {0}]
  %s13 = inlined_call_operand.hbm [shape: f32[8,128], index: 13, kind: output, shape index: {1}]
  %s14 = inlined_call_operand.hbm [shape: f32[8,128], index: 14, kind: output, shape index: {2}]
  %15 = xla_tuple %s12, %s13, %s14
  %s16 = sld [smem:[#allocation0]]
  $region102: #{tpu_custom_call.1} parent=0
    _
  %s18 = ssub.s32 1, %s16
  %s19 = scalar_select 0, %s18, %s16
  $region1: #{tpu_custom_call.1} parent=0
    #allocation2 [shape = 'u8[4096]{0}', space=vmem, size = 0x1000, scoped, tag = 'input window, operand 0, single buffered']
    #allocation3 [shape = 's32[1]{0}', space=sflag, size = 0x4, scoped, tag = 'scoped memory for tpu_custom_call.1']
    #allocation4 [shape = 's32[1]{0}', space=sflag, size = 0x4, scoped, tag = 'scoped memory for tpu_custom_call.1']
    #allocation5 [shape = 'u8[4096]{0}', space=vmem, size = 0x1000, scoped, tag = 'input window, operand 1, single buffered']
    #allocation6 [shape = 's32[1]{0}', space=sflag, size = 0x4, scoped, tag = 'scoped memory for tpu_custom_call.1']
    #allocation7 [shape = 'u8[65536]{0}', space=vmem, size = 0x10000, scoped, tag = 'input window, operand 2, single buffered']
    #allocation8 [shape = 'u8[65536]{0}', space=vmem, size = 0x10000, scoped, tag = 'input window, operand 4, single buffered']
    #allocation9 [shape = 's32[1]{0}', space=sflag, size = 0x4, scoped, tag = 'scoped memory for tpu_custom_call.1']
    #allocation10 [shape = 'u8[65536]{0}', space=vmem, size = 0x10000, scoped, tag = 'input window, operand 6, single buffered']
    #allocation11 [shape = 'u8[65536]{0}', space=vmem, size = 0x10000, scoped, tag = 'input window, operand 8, single buffered']
    #allocation12 [shape = 's32[1]{0}', space=sflag, size = 0x4, scoped, tag = 'scoped memory for tpu_custom_call.1']
    #allocation13 [shape = 'u8[65536]{0}', space=vmem, size = 0x10000, scoped, tag = 'input window, operand 10, single buffered']
    #allocation14 [shape = 'u8[4096]{0}', space=vmem, size = 0x1000, scoped, tag = 'output window, operand 0, single buffered']
    #allocation15 [shape = 'u8[4096]{0}', space=vmem, size = 0x1000, scoped, tag = 'output window, operand 1, single buffered']
    #allocation16 [shape = 's32[1]{0}', space=sflag, size = 0x4, scoped, tag = 'scoped memory for tpu_custom_call.1']
    #allocation17 [shape = 'u8[4096]{0}', space=vmem, size = 0x1000, scoped, tag = 'output window, operand 2, single buffered']
    %20 = vsyncpa [#allocation3], 0
    %21 = vsyncpa [#allocation6], 0
    %22 = vsyncpa [#allocation9], 0
    %23 = vsyncpa [#allocation12], 0
    %24 = vsyncpa [#allocation4], 0
    %25 = vsyncpa [#allocation16], 0
    // Predicated region
    $region2: #{tpu_custom_call.1} parent=1 // pred_check
      _
    $region3: #{tpu_custom_call.1} parent=1 // pred_check_branch
      %27 = sbr.rel (0) target = $region5
    $region4: #{tpu_custom_call.1} parent=1 // pred_region
      %s29 = ssub.s32 128, 128
      %30 = vsyncadd [#allocation3], %s29
      %s32 = sshll.u32 [#allocation2], 4
      %s33 = int_to_ptr.vmem [resolvable:$true] %s32
      %35 = dma.hbm_to_vmem [thread:$0]  %s0, 128, %s33, [#allocation3]
    $region5: #{tpu_custom_call.1} parent=1 // pred_fallthru
      _
    // Predicated region
    $region6: #{tpu_custom_call.1} parent=1 // pred_check
      _
    $region7: #{tpu_custom_call.1} parent=1 // pred_check_branch
      %37 = sbr.rel (0) target = $region9
    $region8: #{tpu_custom_call.1} parent=1 // pred_region
      %s39 = ssub.s32 128, 128
      %40 = vsyncadd [#allocation6], %s39
      %s42 = sshll.u32 [#allocation5], 4
      %s43 = int_to_ptr.vmem [resolvable:$true] %s42
      %45 = dma.hbm_to_vmem [thread:$0]  %s1, 128, %s43, [#allocation6]
    $region9: #{tpu_custom_call.1} parent=1 // pred_fallthru
      _
    // Predicated region
    $region10: #{tpu_custom_call.1} parent=1 // pred_check
      _
    $region11: #{tpu_custom_call.1} parent=1 // pred_check_branch
      %47 = sbr.rel (0) target = $region13
    $region12: #{tpu_custom_call.1} parent=1 // pred_region
      %s49 = ssub.s32 2048, 2048
      %50 = vsyncadd [#allocation6], %s49
      %s51 = sshll.u32 [#allocation7], 4
      %s52 = int_to_ptr.vmem [resolvable:$true] %s51
      %57 = dma.hbm_to_vmem [thread:$0]  %s2, 2048, %s52, [#allocation6], 128, 128, 8
    $region13: #{tpu_custom_call.1} parent=1 // pred_fallthru
      _
    // Predicated region
    $region14: #{tpu_custom_call.1} parent=1 // pred_check
      _
    $region15: #{tpu_custom_call.1} parent=1 // pred_check_branch
      %59 = sbr.rel (0) target = $region17
    $region16: #{tpu_custom_call.1} parent=1 // pred_region
      _
    $region17: #{tpu_custom_call.1} parent=1 // pred_fallthru
      _
    // Predicated region
    $region18: #{tpu_custom_call.1} parent=1 // pred_check
      _
    $region19: #{tpu_custom_call.1} parent=1 // pred_check_branch
      %61 = sbr.rel (0) target = $region21
    $region20: #{tpu_custom_call.1} parent=1 // pred_region
      %s63 = ssub.s32 2048, 2048
      %64 = vsyncadd [#allocation9], %s63
      %s65 = sshll.u32 [#allocation8], 4
      %s66 = int_to_ptr.vmem [resolvable:$true] %s65
      %71 = dma.hbm_to_vmem [thread:$0]  %s4, 2048, %s66, [#allocation9], 128, 128, 8
    $region21: #{tpu_custom_call.1} parent=1 // pred_fallthru
      _
    // Predicated region
    $region22: #{tpu_custom_call.1} parent=1 // pred_check
      _
    $region23: #{tpu_custom_call.1} parent=1 // pred_check_branch
      %73 = sbr.rel (0) target = $region25
    $region24: #{tpu_custom_call.1} parent=1 // pred_region
      _
    $region25: #{tpu_custom_call.1} parent=1 // pred_fallthru
      _
    // Predicated region
    $region26: #{tpu_custom_call.1} parent=1 // pred_check
      _
    $region27: #{tpu_custom_call.1} parent=1 // pred_check_branch
      %75 = sbr.rel (0) target = $region29
    $region28: #{tpu_custom_call.1} parent=1 // pred_region
      %s77 = ssub.s32 2048, 2048
      %78 = vsyncadd [#allocation9], %s77
      %s79 = sshll.u32 [#allocation10], 4
      %s80 = int_to_ptr.vmem [resolvable:$true] %s79
      %85 = dma.hbm_to_vmem [thread:$0]  %s6, 2048, %s80, [#allocation9], 128, 128, 8
    $region29: #{tpu_custom_call.1} parent=1 // pred_fallthru
      _
    // Predicated region
    $region30: #{tpu_custom_call.1} parent=1 // pred_check
      _
    $region31: #{tpu_custom_call.1} parent=1 // pred_check_branch
      %87 = sbr.rel (0) target = $region33
    $region32: #{tpu_custom_call.1} parent=1 // pred_region
      _
    $region33: #{tpu_custom_call.1} parent=1 // pred_fallthru
      _
    // Predicated region
    $region34: #{tpu_custom_call.1} parent=1 // pred_check
      _
    $region35: #{tpu_custom_call.1} parent=1 // pred_check_branch
      %89 = sbr.rel (0) target = $region37
    $region36: #{tpu_custom_call.1} parent=1 // pred_region
      %s91 = ssub.s32 2048, 2048
      %92 = vsyncadd [#allocation12], %s91
      %s93 = sshll.u32 [#allocation11], 4
      %s94 = int_to_ptr.vmem [resolvable:$true] %s93
      %99 = dma.hbm_to_vmem [thread:$0]  %s8, 2048, %s94, [#allocation12], 128, 128, 8
    $region37: #{tpu_custom_call.1} parent=1 // pred_fallthru
      _
    // Predicated region
    $region38: #{tpu_custom_call.1} parent=1 // pred_check
      _
    $region39: #{tpu_custom_call.1} parent=1 // pred_check_branch
      %101 = sbr.rel (0) target = $region41
    $region40: #{tpu_custom_call.1} parent=1 // pred_region
      _
    $region41: #{tpu_custom_call.1} parent=1 // pred_fallthru
      _
    // Predicated region
    $region42: #{tpu_custom_call.1} parent=1 // pred_check
      _
    $region43: #{tpu_custom_call.1} parent=1 // pred_check_branch
      %103 = sbr.rel (0) target = $region45
    $region44: #{tpu_custom_call.1} parent=1 // pred_region
      %s105 = ssub.s32 2048, 2048
      %106 = vsyncadd [#allocation12], %s105
      %s107 = sshll.u32 [#allocation13], 4
      %s108 = int_to_ptr.vmem [resolvable:$true] %s107
      %113 = dma.hbm_to_vmem [thread:$0]  %s10, 2048, %s108, [#allocation12], 128, 128, 8
    $region45: #{tpu_custom_call.1} parent=1 // pred_fallthru
      _
    // Predicated region
    $region46: #{tpu_custom_call.1} parent=1 // pred_check
      _
    $region47: #{tpu_custom_call.1} parent=1 // pred_check_branch
      %115 = sbr.rel (0) target = $region49
    $region48: #{tpu_custom_call.1} parent=1 // pred_region
      _
    $region49: #{tpu_custom_call.1} parent=1 // pred_fallthru
      _
    // Predicated region
    $region50: #{tpu_custom_call.1} parent=1 // pred_check
      _
    $region51: #{tpu_custom_call.1} parent=1 // pred_check_branch
      %117 = sbr.rel (0) target = $region53
    $region52: #{tpu_custom_call.1} parent=1 // pred_region
      %118 = dma.done [#allocation3], 128
    $region53: #{tpu_custom_call.1} parent=1 // pred_fallthru
      _
    // Predicated region
    $region54: #{tpu_custom_call.1} parent=1 // pred_check
      _
    $region55: #{tpu_custom_call.1} parent=1 // pred_check_branch
      %120 = sbr.rel (0) target = $region57
    $region56: #{tpu_custom_call.1} parent=1 // pred_region
      %121 = dma.done [#allocation6], 128
    $region57: #{tpu_custom_call.1} parent=1 // pred_fallthru
      _
    // Predicated region
    $region58: #{tpu_custom_call.1} parent=1 // pred_check
      _
    $region59: #{tpu_custom_call.1} parent=1 // pred_check_branch
      %123 = sbr.rel (0) target = $region61
    $region60: #{tpu_custom_call.1} parent=1 // pred_region
      %124 = dma.done [#allocation6], 2048
    $region61: #{tpu_custom_call.1} parent=1 // pred_fallthru
      _
    // Predicated region
    $region62: #{tpu_custom_call.1} parent=1 // pred_check
      _
    $region63: #{tpu_custom_call.1} parent=1 // pred_check_branch
      %126 = sbr.rel (0) target = $region65
    $region64: #{tpu_custom_call.1} parent=1 // pred_region
      %127 = dma.done [#allocation9], 2048
    $region65: #{tpu_custom_call.1} parent=1 // pred_fallthru
      _
    // Predicated region
    $region66: #{tpu_custom_call.1} parent=1 // pred_check
      _
    $region67: #{tpu_custom_call.1} parent=1 // pred_check_branch
      %129 = sbr.rel (0) target = $region69
    $region68: #{tpu_custom_call.1} parent=1 // pred_region
      %130 = dma.done [#allocation9], 2048
    $region69: #{tpu_custom_call.1} parent=1 // pred_fallthru
      _
    // Predicated region
    $region70: #{tpu_custom_call.1} parent=1 // pred_check
      _
    $region71: #{tpu_custom_call.1} parent=1 // pred_check_branch
      %132 = sbr.rel (0) target = $region73
    $region72: #{tpu_custom_call.1} parent=1 // pred_region
      %133 = dma.done [#allocation12], 2048
    $region73: #{tpu_custom_call.1} parent=1 // pred_fallthru
      _
    // Predicated region
    $region74: #{tpu_custom_call.1} parent=1 // pred_check
      _
    $region75: #{tpu_custom_call.1} parent=1 // pred_check_branch
      %135 = sbr.rel (0) target = $region77
    $region76: #{tpu_custom_call.1} parent=1 // pred_region
      %136 = dma.done [#allocation12], 2048
    $region77: #{tpu_custom_call.1} parent=1 // pred_fallthru
      _
    %v137 = vld [vmem:[#allocation2] sm:$0xff]
    %v138 = vld [vmem:[#allocation7] sm:$0xff]
    %v139 = vld [vmem:[#allocation7 + $0x8] sm:$0xff]
    %v140 = vld [vmem:[#allocation7 + $0x10] sm:$0xff]
    %v141 = vld [vmem:[#allocation7 + $0x18] sm:$0xff]
    %v142 = vld [vmem:[#allocation7 + $0x20] sm:$0xff]
    %v143 = vld [vmem:[#allocation7 + $0x28] sm:$0xff]
    %v144 = vld [vmem:[#allocation7 + $0x30] sm:$0xff]
    %v145 = vld [vmem:[#allocation7 + $0x38] sm:$0xff]
    %v146 = vld [vmem:[#allocation7 + $0x40] sm:$0xff]
    %v147 = vld [vmem:[#allocation7 + $0x48] sm:$0xff]
    %v148 = vld [vmem:[#allocation7 + $0x50] sm:$0xff]
    %v149 = vld [vmem:[#allocation7 + $0x58] sm:$0xff]
    %v150 = vld [vmem:[#allocation7 + $0x60] sm:$0xff]
    %v151 = vld [vmem:[#allocation7 + $0x68] sm:$0xff]
    %v152 = vld [vmem:[#allocation7 + $0x70] sm:$0xff]
    %v153 = vld [vmem:[#allocation7 + $0x78] sm:$0xff]
    %v154 = vld [vmem:[%s3] sm:$0x1]
    %v156 = vlaneseq
    %v157 = vshrl.u32 %v156, 7
    %v158 = vsub.s32 0, %v157
    %v159 = vrot.slane %v154, %v158
    %161 = vmatprep.subr.mxu0 0.0
    %162 = vmatpush1.xpose.msra.mxu0 %v138
    %163 = vmatprep.subr.mxu0 0.0
    %164 = vmatpush1.xpose.msra.mxu0 %v139
    %165 = vmatprep.subr.mxu0 0.0
    %166 = vmatpush1.xpose.msra.mxu0 %v140
    %167 = vmatprep.subr.mxu0 0.0
    %168 = vmatpush1.xpose.msra.mxu0 %v141
    %169 = vmatprep.subr.mxu0 0.0
    %170 = vmatpush1.xpose.msra.mxu0 %v142
    %171 = vmatprep.subr.mxu0 0.0
    %172 = vmatpush1.xpose.msra.mxu0 %v143
    %173 = vmatprep.subr.mxu0 0.0
    %174 = vmatpush1.xpose.msra.mxu0 %v144
    %175 = vmatprep.subr.mxu0 0.0
    %176 = vmatpush1.xpose.msra.mxu0 %v145
    %177 = vmatprep.subr.mxu0 0.0
    %178 = vmatpush1.xpose.msra.mxu0 %v146
    %179 = vmatprep.subr.mxu0 0.0
    %180 = vmatpush1.xpose.msra.mxu0 %v147
    %181 = vmatprep.subr.mxu0 0.0
    %182 = vmatpush1.xpose.msra.mxu0 %v148
    %183 = vmatprep.subr.mxu0 0.0
    %184 = vmatpush1.xpose.msra.mxu0 %v149
    %185 = vmatprep.subr.mxu0 0.0
    %186 = vmatpush1.xpose.msra.mxu0 %v150
    %187 = vmatprep.subr.mxu0 0.0
    %188 = vmatpush1.xpose.msra.mxu0 %v151
    %189 = vmatprep.subr.mxu0 0.0
    %190 = vmatpush1.xpose.msra.mxu0 %v152
    %191 = vmatprep.subr.mxu0 0.0
    %192 = vmatpush1.xpose.msra.mxu0 %v153
    %193 = vmatprep.subr.mxu0 0.0
    %194 = vmatpush1.xpose.msra.mxu0 0.0
    %195 = vmatprep.subr.mxu0 0.0
    %196 = vmatpush1.xpose.msra.mxu0 0.0
    %197 = vmatprep.subr.mxu0 0.0
    %198 = vmatpush1.xpose.msra.mxu0 0.0
    %199 = vmatprep.subr.mxu0 0.0
    %200 = vmatpush1.xpose.msra.mxu0 0.0
    %201 = vmatprep.subr.mxu0 0.0
    %202 = vmatpush1.xpose.msra.mxu0 0.0
    %203 = vmatprep.subr.mxu0 0.0
    %204 = vmatpush1.xpose.msra.mxu0 0.0
    %205 = vmatprep.subr.mxu0 0.0
    %206 = vmatpush1.xpose.msra.mxu0 0.0
    %207 = vmatprep.subr.mxu0 0.0
    %208 = vmatpush1.xpose.msra.mxu0 0.0
    %209 = vmatprep.subr.mxu0 0.0
    %210 = vmatpush1.xpose.msra.mxu0 0.0
    %211 = vmatprep.subr.mxu0 0.0
    %212 = vmatpush1.xpose.msra.mxu0 0.0
    %213 = vmatprep.subr.mxu0 0.0
    %214 = vmatpush1.xpose.msra.mxu0 0.0
    %215 = vmatprep.subr.mxu0 0.0
    %216 = vmatpush1.xpose.msra.mxu0 0.0
    %217 = vmatprep.subr.mxu0 0.0
    %218 = vmatpush1.xpose.msra.mxu0 0.0
    %219 = vmatprep.subr.mxu0 0.0
    %220 = vmatpush1.xpose.msra.mxu0 0.0
    %221 = vmatprep.subr.mxu0 0.0
    %222 = vmatpush1.xpose.msra.mxu0 0.0
    %223 = vmatprep.subr.mxu0 0.0
    %224 = vmatpush1.xpose.msra.mxu0 0.0
    %225 = vmatprep.mubr.f32.mxu0 0.0
    %226 = vmatmul.mubr.f32.gmra.mrb[0].mxu0 %v137
    %v227 = vpop.f32.mrb[0].mxu0
    %v228 = vadd.f32 %v159, %v227
    %v229 = vpop.f32.mrb[0].mxu0
    %230 = vdwg.mxu0
    %v231 = vmax.f32 %v228, 0.0
    %v232 = vld [vmem:[#allocation8] sm:$0xff]
    %v233 = vld [vmem:[#allocation8 + $0x8] sm:$0xff]
    %v234 = vld [vmem:[#allocation8 + $0x10] sm:$0xff]
    %v235 = vld [vmem:[#allocation8 + $0x18] sm:$0xff]
    %v236 = vld [vmem:[#allocation8 + $0x20] sm:$0xff]
    %v237 = vld [vmem:[#allocation8 + $0x28] sm:$0xff]
    %v238 = vld [vmem:[#allocation8 + $0x30] sm:$0xff]
    %v239 = vld [vmem:[#allocation8 + $0x38] sm:$0xff]
    %v240 = vld [vmem:[#allocation8 + $0x40] sm:$0xff]
    %v241 = vld [vmem:[#allocation8 + $0x48] sm:$0xff]
    %v242 = vld [vmem:[#allocation8 + $0x50] sm:$0xff]
    %v243 = vld [vmem:[#allocation8 + $0x58] sm:$0xff]
    %v244 = vld [vmem:[#allocation8 + $0x60] sm:$0xff]
    %v245 = vld [vmem:[#allocation8 + $0x68] sm:$0xff]
    %v246 = vld [vmem:[#allocation8 + $0x70] sm:$0xff]
    %v247 = vld [vmem:[#allocation8 + $0x78] sm:$0xff]
    %v248 = vld [vmem:[%s5] sm:$0x1]
    %v250 = vlaneseq
    %v251 = vshrl.u32 %v250, 7
    %v252 = vsub.s32 0, %v251
    %v253 = vrot.slane %v248, %v252
    %255 = vmatprep.subr.mxu0 0.0
    %256 = vmatpush1.xpose.msra.mxu0 %v232
    %257 = vmatprep.subr.mxu0 0.0
    %258 = vmatpush1.xpose.msra.mxu0 %v233
    %259 = vmatprep.subr.mxu0 0.0
    %260 = vmatpush1.xpose.msra.mxu0 %v234
    %261 = vmatprep.subr.mxu0 0.0
    %262 = vmatpush1.xpose.msra.mxu0 %v235
    %263 = vmatprep.subr.mxu0 0.0
    %264 = vmatpush1.xpose.msra.mxu0 %v236
    %265 = vmatprep.subr.mxu0 0.0
    %266 = vmatpush1.xpose.msra.mxu0 %v237
    %267 = vmatprep.subr.mxu0 0.0
    %268 = vmatpush1.xpose.msra.mxu0 %v238
    %269 = vmatprep.subr.mxu0 0.0
    %270 = vmatpush1.xpose.msra.mxu0 %v239
    %271 = vmatprep.subr.mxu0 0.0
    %272 = vmatpush1.xpose.msra.mxu0 %v240
    %273 = vmatprep.subr.mxu0 0.0
    %274 = vmatpush1.xpose.msra.mxu0 %v241
    %275 = vmatprep.subr.mxu0 0.0
    %276 = vmatpush1.xpose.msra.mxu0 %v242
    %277 = vmatprep.subr.mxu0 0.0
    %278 = vmatpush1.xpose.msra.mxu0 %v243
    %279 = vmatprep.subr.mxu0 0.0
    %280 = vmatpush1.xpose.msra.mxu0 %v244
    %281 = vmatprep.subr.mxu0 0.0
    %282 = vmatpush1.xpose.msra.mxu0 %v245
    %283 = vmatprep.subr.mxu0 0.0
    %284 = vmatpush1.xpose.msra.mxu0 %v246
    %285 = vmatprep.subr.mxu0 0.0
    %286 = vmatpush1.xpose.msra.mxu0 %v247
    %287 = vmatprep.subr.mxu0 0.0
    %288 = vmatpush1.xpose.msra.mxu0 0.0
    %289 = vmatprep.subr.mxu0 0.0
    %290 = vmatpush1.xpose.msra.mxu0 0.0
    %291 = vmatprep.subr.mxu0 0.0
    %292 = vmatpush1.xpose.msra.mxu0 0.0
    %293 = vmatprep.subr.mxu0 0.0
    %294 = vmatpush1.xpose.msra.mxu0 0.0
    %295 = vmatprep.subr.mxu0 0.0
    %296 = vmatpush1.xpose.msra.mxu0 0.0
    %297 = vmatprep.subr.mxu0 0.0
    %298 = vmatpush1.xpose.msra.mxu0 0.0
    %299 = vmatprep.subr.mxu0 0.0
    %300 = vmatpush1.xpose.msra.mxu0 0.0
    %301 = vmatprep.subr.mxu0 0.0
    %302 = vmatpush1.xpose.msra.mxu0 0.0
    %303 = vmatprep.subr.mxu0 0.0
    %304 = vmatpush1.xpose.msra.mxu0 0.0
    %305 = vmatprep.subr.mxu0 0.0
    %306 = vmatpush1.xpose.msra.mxu0 0.0
    %307 = vmatprep.subr.mxu0 0.0
    %308 = vmatpush1.xpose.msra.mxu0 0.0
    %309 = vmatprep.subr.mxu0 0.0
    %310 = vmatpush1.xpose.msra.mxu0 0.0
    %311 = vmatprep.subr.mxu0 0.0
    %312 = vmatpush1.xpose.msra.mxu0 0.0
    %313 = vmatprep.subr.mxu0 0.0
    %314 = vmatpush1.xpose.msra.mxu0 0.0
    %315 = vmatprep.subr.mxu0 0.0
    %316 = vmatpush1.xpose.msra.mxu0 0.0
    %317 = vmatprep.subr.mxu0 0.0
    %318 = vmatpush1.xpose.msra.mxu0 0.0
    %319 = vmatprep.mubr.f32.mxu0 0.0
    %320 = vmatmul.mubr.f32.gmra.mrb[0].mxu0 %v231
    %v321 = vpop.f32.mrb[0].mxu0
    %v322 = vadd.f32 %v253, %v321
    %v323 = vpop.f32.mrb[0].mxu0
    %324 = vdwg.mxu0
    %v325 = vld [vmem:[#allocation10] sm:$0xff]
    %v326 = vld [vmem:[#allocation10 + $0x8] sm:$0xff]
    %v327 = vld [vmem:[#allocation10 + $0x10] sm:$0xff]
    %v328 = vld [vmem:[#allocation10 + $0x18] sm:$0xff]
    %v329 = vld [vmem:[#allocation10 + $0x20] sm:$0xff]
    %v330 = vld [vmem:[#allocation10 + $0x28] sm:$0xff]
    %v331 = vld [vmem:[#allocation10 + $0x30] sm:$0xff]
    %v332 = vld [vmem:[#allocation10 + $0x38] sm:$0xff]
    %v333 = vld [vmem:[#allocation10 + $0x40] sm:$0xff]
    %v334 = vld [vmem:[#allocation10 + $0x48] sm:$0xff]
    %v335 = vld [vmem:[#allocation10 + $0x50] sm:$0xff]
    %v336 = vld [vmem:[#allocation10 + $0x58] sm:$0xff]
    %v337 = vld [vmem:[#allocation10 + $0x60] sm:$0xff]
    %v338 = vld [vmem:[#allocation10 + $0x68] sm:$0xff]
    %v339 = vld [vmem:[#allocation10 + $0x70] sm:$0xff]
    %v340 = vld [vmem:[#allocation10 + $0x78] sm:$0xff]
    %v341 = vld [vmem:[%s7] sm:$0x1]
    %v343 = vlaneseq
    %v344 = vshrl.u32 %v343, 7
    %v345 = vsub.s32 0, %v344
    %v346 = vrot.slane %v341, %v345
    %348 = vmatprep.subr.mxu0 0.0
    %349 = vmatpush1.xpose.msra.mxu0 %v325
    %350 = vmatprep.subr.mxu0 0.0
    %351 = vmatpush1.xpose.msra.mxu0 %v326
    %352 = vmatprep.subr.mxu0 0.0
    %353 = vmatpush1.xpose.msra.mxu0 %v327
    %354 = vmatprep.subr.mxu0 0.0
    %355 = vmatpush1.xpose.msra.mxu0 %v328
    %356 = vmatprep.subr.mxu0 0.0
    %357 = vmatpush1.xpose.msra.mxu0 %v329
    %358 = vmatprep.subr.mxu0 0.0
    %359 = vmatpush1.xpose.msra.mxu0 %v330
    %360 = vmatprep.subr.mxu0 0.0
    %361 = vmatpush1.xpose.msra.mxu0 %v331
    %362 = vmatprep.subr.mxu0 0.0
    %363 = vmatpush1.xpose.msra.mxu0 %v332
    %364 = vmatprep.subr.mxu0 0.0
    %365 = vmatpush1.xpose.msra.mxu0 %v333
    %366 = vmatprep.subr.mxu0 0.0
    %367 = vmatpush1.xpose.msra.mxu0 %v334
    %368 = vmatprep.subr.mxu0 0.0
    %369 = vmatpush1.xpose.msra.mxu0 %v335
    %370 = vmatprep.subr.mxu0 0.0
    %371 = vmatpush1.xpose.msra.mxu0 %v336
    %372 = vmatprep.subr.mxu0 0.0
    %373 = vmatpush1.xpose.msra.mxu0 %v337
    %374 = vmatprep.subr.mxu0 0.0
    %375 = vmatpush1.xpose.msra.mxu0 %v338
    %376 = vmatprep.subr.mxu0 0.0
    %377 = vmatpush1.xpose.msra.mxu0 %v339
    %378 = vmatprep.subr.mxu0 0.0
    %379 = vmatpush1.xpose.msra.mxu0 %v340
    %380 = vmatprep.subr.mxu0 0.0
    %381 = vmatpush1.xpose.msra.mxu0 0.0
    %382 = vmatprep.subr.mxu0 0.0
    %383 = vmatpush1.xpose.msra.mxu0 0.0
    %384 = vmatprep.subr.mxu0 0.0
    %385 = vmatpush1.xpose.msra.mxu0 0.0
    %386 = vmatprep.subr.mxu0 0.0
    %387 = vmatpush1.xpose.msra.mxu0 0.0
    %388 = vmatprep.subr.mxu0 0.0
    %389 = vmatpush1.xpose.msra.mxu0 0.0
    %390 = vmatprep.subr.mxu0 0.0
    %391 = vmatpush1.xpose.msra.mxu0 0.0
    %392 = vmatprep.subr.mxu0 0.0
    %393 = vmatpush1.xpose.msra.mxu0 0.0
    %394 = vmatprep.subr.mxu0 0.0
    %395 = vmatpush1.xpose.msra.mxu0 0.0
    %396 = vmatprep.subr.mxu0 0.0
    %397 = vmatpush1.xpose.msra.mxu0 0.0
    %398 = vmatprep.subr.mxu0 0.0
    %399 = vmatpush1.xpose.msra.mxu0 0.0
    %400 = vmatprep.subr.mxu0 0.0
    %401 = vmatpush1.xpose.msra.mxu0 0.0
    %402 = vmatprep.subr.mxu0 0.0
    %403 = vmatpush1.xpose.msra.mxu0 0.0
    %404 = vmatprep.subr.mxu0 0.0
    %405 = vmatpush1.xpose.msra.mxu0 0.0
    %406 = vmatprep.subr.mxu0 0.0
    %407 = vmatpush1.xpose.msra.mxu0 0.0
    %408 = vmatprep.subr.mxu0 0.0
    %409 = vmatpush1.xpose.msra.mxu0 0.0
    %410 = vmatprep.subr.mxu0 0.0
    %411 = vmatpush1.xpose.msra.mxu0 0.0
    %412 = vmatprep.mubr.f32.mxu0 0.0
    %413 = vmatmul.mubr.f32.gmra.mrb[0].mxu0 %v231
    %v414 = vpop.f32.mrb[0].mxu0
    %v415 = vadd.f32 %v346, %v414
    %v416 = vpop.f32.mrb[0].mxu0
    %417 = vdwg.mxu0
    %v418 = vmax.f32 %v415, 0.0
    %v419 = vand.u32 2147483647, %v415
    %v420 = vsub.f32 0.0, %v419
    %v421 = vmul.f32 %v420, 1.442695
    %v422 = vpow.pop %v421
    %v423 = vadd.f32 %v422, 1.0
    %v424 = vlog2.pop %v423
    %v425 = vmul.f32 %v424, 0.6931472
    %v426 = vadd.f32 %v418, %v425
    %v427 = vrsqrt.pop %v426
    %v428 = vmul.f32 %v426, %v427
    %vm429 = vcmp.eq.f32.partialorder %v426, inf
    %v430 = vsel %vm429, %v426, %v428
    %vm431 = vcmp.eq.f32.partialorder %v426, 0.0
    %v432 = vand.u32 %v426, 2147483648
    %v433 = vsel %vm431, %v432, %v430
    %v434 = vld [vmem:[#allocation5] sm:$0xff]
    %v435 = vmul.f32 %v433, %v434
    %v436 = vadd.f32 %v322, %v435
    %v437 = vld [vmem:[#allocation11] sm:$0xff]
    %v438 = vld [vmem:[#allocation11 + $0x8] sm:$0xff]
    %v439 = vld [vmem:[#allocation11 + $0x10] sm:$0xff]
    %v440 = vld [vmem:[#allocation11 + $0x18] sm:$0xff]
    %v441 = vld [vmem:[#allocation11 + $0x20] sm:$0xff]
    %v442 = vld [vmem:[#allocation11 + $0x28] sm:$0xff]
    %v443 = vld [vmem:[#allocation11 + $0x30] sm:$0xff]
    %v444 = vld [vmem:[#allocation11 + $0x38] sm:$0xff]
    %v445 = vld [vmem:[#allocation11 + $0x40] sm:$0xff]
    %v446 = vld [vmem:[#allocation11 + $0x48] sm:$0xff]
    %v447 = vld [vmem:[#allocation11 + $0x50] sm:$0xff]
    %v448 = vld [vmem:[#allocation11 + $0x58] sm:$0xff]
    %v449 = vld [vmem:[#allocation11 + $0x60] sm:$0xff]
    %v450 = vld [vmem:[#allocation11 + $0x68] sm:$0xff]
    %v451 = vld [vmem:[#allocation11 + $0x70] sm:$0xff]
    %v452 = vld [vmem:[#allocation11 + $0x78] sm:$0xff]
    %v453 = vld [vmem:[%s9] sm:$0x1]
    %v455 = vlaneseq
    %v456 = vshrl.u32 %v455, 7
    %v457 = vsub.s32 0, %v456
    %v458 = vrot.slane %v453, %v457
    %460 = vmatprep.subr.mxu0 0.0
    %461 = vmatpush1.xpose.msra.mxu0 %v437
    %462 = vmatprep.subr.mxu0 0.0
    %463 = vmatpush1.xpose.msra.mxu0 %v438
    %464 = vmatprep.subr.mxu0 0.0
    %465 = vmatpush1.xpose.msra.mxu0 %v439
    %466 = vmatprep.subr.mxu0 0.0
    %467 = vmatpush1.xpose.msra.mxu0 %v440
    %468 = vmatprep.subr.mxu0 0.0
    %469 = vmatpush1.xpose.msra.mxu0 %v441
    %470 = vmatprep.subr.mxu0 0.0
    %471 = vmatpush1.xpose.msra.mxu0 %v442
    %472 = vmatprep.subr.mxu0 0.0
    %473 = vmatpush1.xpose.msra.mxu0 %v443
    %474 = vmatprep.subr.mxu0 0.0
    %475 = vmatpush1.xpose.msra.mxu0 %v444
    %476 = vmatprep.subr.mxu0 0.0
    %477 = vmatpush1.xpose.msra.mxu0 %v445
    %478 = vmatprep.subr.mxu0 0.0
    %479 = vmatpush1.xpose.msra.mxu0 %v446
    %480 = vmatprep.subr.mxu0 0.0
    %481 = vmatpush1.xpose.msra.mxu0 %v447
    %482 = vmatprep.subr.mxu0 0.0
    %483 = vmatpush1.xpose.msra.mxu0 %v448
    %484 = vmatprep.subr.mxu0 0.0
    %485 = vmatpush1.xpose.msra.mxu0 %v449
    %486 = vmatprep.subr.mxu0 0.0
    %487 = vmatpush1.xpose.msra.mxu0 %v450
    %488 = vmatprep.subr.mxu0 0.0
    %489 = vmatpush1.xpose.msra.mxu0 %v451
    %490 = vmatprep.subr.mxu0 0.0
    %491 = vmatpush1.xpose.msra.mxu0 %v452
    %492 = vmatprep.subr.mxu0 0.0
    %493 = vmatpush1.xpose.msra.mxu0 0.0
    %494 = vmatprep.subr.mxu0 0.0
    %495 = vmatpush1.xpose.msra.mxu0 0.0
    %496 = vmatprep.subr.mxu0 0.0
    %497 = vmatpush1.xpose.msra.mxu0 0.0
    %498 = vmatprep.subr.mxu0 0.0
    %499 = vmatpush1.xpose.msra.mxu0 0.0
    %500 = vmatprep.subr.mxu0 0.0
    %501 = vmatpush1.xpose.msra.mxu0 0.0
    %502 = vmatprep.subr.mxu0 0.0
    %503 = vmatpush1.xpose.msra.mxu0 0.0
    %504 = vmatprep.subr.mxu0 0.0
    %505 = vmatpush1.xpose.msra.mxu0 0.0
    %506 = vmatprep.subr.mxu0 0.0
    %507 = vmatpush1.xpose.msra.mxu0 0.0
    %508 = vmatprep.subr.mxu0 0.0
    %509 = vmatpush1.xpose.msra.mxu0 0.0
    %510 = vmatprep.subr.mxu0 0.0
    %511 = vmatpush1.xpose.msra.mxu0 0.0
    %512 = vmatprep.subr.mxu0 0.0
    %513 = vmatpush1.xpose.msra.mxu0 0.0
    %514 = vmatprep.subr.mxu0 0.0
    %515 = vmatpush1.xpose.msra.mxu0 0.0
    %516 = vmatprep.subr.mxu0 0.0
    %517 = vmatpush1.xpose.msra.mxu0 0.0
    %518 = vmatprep.subr.mxu0 0.0
    %519 = vmatpush1.xpose.msra.mxu0 0.0
    %520 = vmatprep.subr.mxu0 0.0
    %521 = vmatpush1.xpose.msra.mxu0 0.0
    %522 = vmatprep.subr.mxu0 0.0
    %523 = vmatpush1.xpose.msra.mxu0 0.0
    %524 = vmatprep.mubr.f32.mxu0 0.0
    %525 = vmatmul.mubr.f32.gmra.mrb[0].mxu0 %v436
    %v526 = vpop.f32.mrb[0].mxu0
    %v527 = vadd.f32 %v458, %v526
    %v528 = vpop.f32.mrb[0].mxu0
    %529 = vdwg.mxu0
    %v530 = vmax.f32 %v527, 0.0
    %v531 = vld [vmem:[#allocation13] sm:$0xff]
    %v532 = vld [vmem:[#allocation13 + $0x8] sm:$0xff]
    %v533 = vld [vmem:[#allocation13 + $0x10] sm:$0xff]
    %v534 = vld [vmem:[#allocation13 + $0x18] sm:$0xff]
    %v535 = vld [vmem:[#allocation13 + $0x20] sm:$0xff]
    %v536 = vld [vmem:[#allocation13 + $0x28] sm:$0xff]
    %v537 = vld [vmem:[#allocation13 + $0x30] sm:$0xff]
    %v538 = vld [vmem:[#allocation13 + $0x38] sm:$0xff]
    %v539 = vld [vmem:[#allocation13 + $0x40] sm:$0xff]
    %v540 = vld [vmem:[#allocation13 + $0x48] sm:$0xff]
    %v541 = vld [vmem:[#allocation13 + $0x50] sm:$0xff]
    %v542 = vld [vmem:[#allocation13 + $0x58] sm:$0xff]
    %v543 = vld [vmem:[#allocation13 + $0x60] sm:$0xff]
    %v544 = vld [vmem:[#allocation13 + $0x68] sm:$0xff]
    %v545 = vld [vmem:[#allocation13 + $0x70] sm:$0xff]
    %v546 = vld [vmem:[#allocation13 + $0x78] sm:$0xff]
    %v547 = vld [vmem:[%s11] sm:$0x1]
    %v549 = vlaneseq
    %v550 = vshrl.u32 %v549, 7
    %v551 = vsub.s32 0, %v550
    %v552 = vrot.slane %v547, %v551
    %554 = vmatprep.subr.mxu0 0.0
    %555 = vmatpush1.xpose.msra.mxu0 %v531
    %556 = vmatprep.subr.mxu0 0.0
    %557 = vmatpush1.xpose.msra.mxu0 %v532
    %558 = vmatprep.subr.mxu0 0.0
    %559 = vmatpush1.xpose.msra.mxu0 %v533
    %560 = vmatprep.subr.mxu0 0.0
    %561 = vmatpush1.xpose.msra.mxu0 %v534
    %562 = vmatprep.subr.mxu0 0.0
    %563 = vmatpush1.xpose.msra.mxu0 %v535
    %564 = vmatprep.subr.mxu0 0.0
    %565 = vmatpush1.xpose.msra.mxu0 %v536
    %566 = vmatprep.subr.mxu0 0.0
    %567 = vmatpush1.xpose.msra.mxu0 %v537
    %568 = vmatprep.subr.mxu0 0.0
    %569 = vmatpush1.xpose.msra.mxu0 %v538
    %570 = vmatprep.subr.mxu0 0.0
    %571 = vmatpush1.xpose.msra.mxu0 %v539
    %572 = vmatprep.subr.mxu0 0.0
    %573 = vmatpush1.xpose.msra.mxu0 %v540
    %574 = vmatprep.subr.mxu0 0.0
    %575 = vmatpush1.xpose.msra.mxu0 %v541
    %576 = vmatprep.subr.mxu0 0.0
    %577 = vmatpush1.xpose.msra.mxu0 %v542
    %578 = vmatprep.subr.mxu0 0.0
    %579 = vmatpush1.xpose.msra.mxu0 %v543
    %580 = vmatprep.subr.mxu0 0.0
    %581 = vmatpush1.xpose.msra.mxu0 %v544
    %582 = vmatprep.subr.mxu0 0.0
    %583 = vmatpush1.xpose.msra.mxu0 %v545
    %584 = vmatprep.subr.mxu0 0.0
    %585 = vmatpush1.xpose.msra.mxu0 %v546
    %586 = vmatprep.subr.mxu0 0.0
    %587 = vmatpush1.xpose.msra.mxu0 0.0
    %588 = vmatprep.subr.mxu0 0.0
    %589 = vmatpush1.xpose.msra.mxu0 0.0
    %590 = vmatprep.subr.mxu0 0.0
    %591 = vmatpush1.xpose.msra.mxu0 0.0
    %592 = vmatprep.subr.mxu0 0.0
    %593 = vmatpush1.xpose.msra.mxu0 0.0
    %594 = vmatprep.subr.mxu0 0.0
    %595 = vmatpush1.xpose.msra.mxu0 0.0
    %596 = vmatprep.subr.mxu0 0.0
    %597 = vmatpush1.xpose.msra.mxu0 0.0
    %598 = vmatprep.subr.mxu0 0.0
    %599 = vmatpush1.xpose.msra.mxu0 0.0
    %600 = vmatprep.subr.mxu0 0.0
    %601 = vmatpush1.xpose.msra.mxu0 0.0
    %602 = vmatprep.subr.mxu0 0.0
    %603 = vmatpush1.xpose.msra.mxu0 0.0
    %604 = vmatprep.subr.mxu0 0.0
    %605 = vmatpush1.xpose.msra.mxu0 0.0
    %606 = vmatprep.subr.mxu0 0.0
    %607 = vmatpush1.xpose.msra.mxu0 0.0
    %608 = vmatprep.subr.mxu0 0.0
    %609 = vmatpush1.xpose.msra.mxu0 0.0
    %610 = vmatprep.subr.mxu0 0.0
    %611 = vmatpush1.xpose.msra.mxu0 0.0
    %612 = vmatprep.subr.mxu0 0.0
    %613 = vmatpush1.xpose.msra.mxu0 0.0
    %614 = vmatprep.subr.mxu0 0.0
    %615 = vmatpush1.xpose.msra.mxu0 0.0
    %616 = vmatprep.subr.mxu0 0.0
    %617 = vmatpush1.xpose.msra.mxu0 0.0
    %618 = vmatprep.mubr.f32.mxu0 0.0
    %619 = vmatmul.mubr.f32.gmra.mrb[0].mxu0 %v530
    %v620 = vpop.f32.mrb[0].mxu0
    %v621 = vadd.f32 %v552, %v620
    %v622 = vpop.f32.mrb[0].mxu0
    %623 = vdwg.mxu0
    %v624 = vsub.f32 0.0, %v621
    %v625 = vmul.f32 %v624, 1.442695
    %v626 = vpow.pop %v625
    %v627 = vadd.f32 %v626, 1.0
    %v628 = vrcp.pop %v627
    %v629 = vmul.f32 1.0, %v628
    %630 = vst [vmem:[#allocation14] sm:$0xff] %v629
    %631 = vst [vmem:[#allocation15] sm:$0xff] %v322
    %632 = vst [vmem:[#allocation17] sm:$0xff] %v426
    // Predicated region
    $region78: #{tpu_custom_call.1} parent=1 // pred_check
      _
    $region79: #{tpu_custom_call.1} parent=1 // pred_check_branch
      %634 = sbr.rel (0) target = $region81
    $region80: #{tpu_custom_call.1} parent=1 // pred_region
      %s636 = ssub.s32 128, 128
      %637 = vsyncadd [#allocation4], %s636
      %s639 = sshll.u32 [#allocation14], 4
      %s640 = int_to_ptr.vmem [resolvable:$true] %s639
      %642 = dma.vmem_to_hbm [thread:$0]  %s640, 128, %s12, [#allocation4]
    $region81: #{tpu_custom_call.1} parent=1 // pred_fallthru
      _
    // Predicated region
    $region82: #{tpu_custom_call.1} parent=1 // pred_check
      _
    $region83: #{tpu_custom_call.1} parent=1 // pred_check_branch
      %644 = sbr.rel (0) target = $region85
    $region84: #{tpu_custom_call.1} parent=1 // pred_region
      %s646 = ssub.s32 128, 128
      %647 = vsyncadd [#allocation16], %s646
      %s649 = sshll.u32 [#allocation15], 4
      %s650 = int_to_ptr.vmem [resolvable:$true] %s649
      %652 = dma.vmem_to_hbm [thread:$0]  %s650, 128, %s13, [#allocation16]
    $region85: #{tpu_custom_call.1} parent=1 // pred_fallthru
      _
    // Predicated region
    $region86: #{tpu_custom_call.1} parent=1 // pred_check
      _
    $region87: #{tpu_custom_call.1} parent=1 // pred_check_branch
      %654 = sbr.rel (0) target = $region89
    $region88: #{tpu_custom_call.1} parent=1 // pred_region
      %s656 = ssub.s32 128, 128
      %657 = vsyncadd [#allocation16], %s656
      %s659 = sshll.u32 [#allocation17], 4
      %s660 = int_to_ptr.vmem [resolvable:$true] %s659
      %662 = dma.vmem_to_hbm [thread:$0]  %s660, 128, %s14, [#allocation16]
    $region89: #{tpu_custom_call.1} parent=1 // pred_fallthru
      _
    // Predicated region
    $region90: #{tpu_custom_call.1} parent=1 // pred_check
      _
    $region91: #{tpu_custom_call.1} parent=1 // pred_check_branch
      %664 = sbr.rel (0) target = $region93
    $region92: #{tpu_custom_call.1} parent=1 // pred_region
      %665 = dma.done [#allocation4], 128
    $region93: #{tpu_custom_call.1} parent=1 // pred_fallthru
      _
    // Predicated region
    $region94: #{tpu_custom_call.1} parent=1 // pred_check
      _
    $region95: #{tpu_custom_call.1} parent=1 // pred_check_branch
      %667 = sbr.rel (0) target = $region97
    $region96: #{tpu_custom_call.1} parent=1 // pred_region
      %668 = dma.done [#allocation16], 128
    $region97: #{tpu_custom_call.1} parent=1 // pred_fallthru
      _
    // Predicated region
    $region98: #{tpu_custom_call.1} parent=1 // pred_check
      _
    $region99: #{tpu_custom_call.1} parent=1 // pred_check_branch
      %670 = sbr.rel (0) target = $region101
    $region100: #{tpu_custom_call.1} parent=1 // pred_region
      %671 = dma.done [#allocation16], 128
    $region101: #{tpu_custom_call.1} parent=1 // pred_fallthru
      _
    %672 = vsyncpa [#allocation3], 1
    %673 = vsyncpa [#allocation6], 1
    %674 = vsyncpa [#allocation9], 1
    %675 = vsyncpa [#allocation12], 1
    %676 = vsyncpa [#allocation4], 1
    %677 = vsyncpa [#allocation16], 1

</llo_original>
